<compile_context>
chip_gen: v5e
topology: v5e:2x2
jax: 0.10.0
libtpu: 0.0.40
codegen_flags: <defaults>
</compile_context>

<pallas_src>
import math

import jax
import jax.numpy as jnp
from jax.experimental import pallas as pl
from jax.experimental.pallas import tpu as pltpu


def _pos_emb_kernel(x_ref, wa_ref, ba_ref, wb_ref, bb_ref, freq_ref, o_ref):
    # x_ref:   [TL, 2*D_in]   interleaved (r, i) input-feature columns
    # wa_ref:  [2*D_in, 2*H]  fused weight: x -> [pr|pi]  (column-interleaved)
    # wb_ref:  [2*D_in, 2*H]  fused weight: x -> [-pi|pr] (column-interleaved)
    # ba/bb:   [1, 2*H]       matching fused biases (f32)
    # freq:    [1, 2*H]       f32; freq[2h] = freq[2h+1] = exp(-log(L)*h/H)
    # o_ref:   [TL, 2*H]      interleaved (r, i) output columns
    x = x_ref[...]
    pa = jnp.dot(x, wa_ref[...], preferred_element_type=jnp.float32) + ba_ref[...]
    pb = jnp.dot(x, wb_ref[...], preferred_element_type=jnp.float32) + bb_ref[...]

    tl = x.shape[0]
    row = jax.lax.broadcasted_iota(jnp.int32, (tl, 1), 0)
    pos = (pl.program_id(1) * tl + row).astype(jnp.float32)     # sequence positions
    phase = pos * freq_ref[...]                                  # [TL, 2*H], f32
    # out_r = pr*cos - pi*sin ; out_i = pr*sin + pi*cos  (already column-interleaved)
    o_ref[...] = (pa * jnp.cos(phase) + pb * jnp.sin(phase)).astype(o_ref.dtype)


def position_embedding(x, w_real, b_real, w_imag, b_imag, max_len, hidden_dim,
                       *, storage_dtype=jnp.float32):
    """x: [B, max_len, input_dim, 2]; weights: [hidden_dim, input_dim] (torch layout)."""
    B, L, D_in, two = x.shape
    assert L == max_len and two == 2
    H = hidden_dim

    # Free view: interleaved (real, imag) feature columns; optional bf16 storage.
    x2 = x.reshape(B, L, 2 * D_in).astype(storage_dtype)

    wrT = w_real.T.astype(jnp.float32)   # [D_in, H]
    wiT = w_imag.T.astype(jnp.float32)   # [D_in, H]
    # Fused weights with BOTH rows (input r/i) and columns (output r/i) interleaved:
    #   pa[:, 2h] = pr[h],  pa[:, 2h+1] = pi[h]
    #   pb[:, 2h] = -pi[h], pb[:, 2h+1] = pr[h]
    w_a = jnp.stack([jnp.stack([wrT, wiT], axis=-1),
                     jnp.stack([-wiT, wrT], axis=-1)], axis=1).reshape(2 * D_in, 2 * H)
    w_b = jnp.stack([jnp.stack([-wiT, wrT], axis=-1),
                     jnp.stack([-wrT, -wiT], axis=-1)], axis=1).reshape(2 * D_in, 2 * H)
    b_a = jnp.stack([b_real - b_imag, b_real + b_imag],
                    axis=-1).reshape(1, 2 * H).astype(jnp.float32)
    b_b = jnp.stack([-(b_real + b_imag), b_real - b_imag],
                    axis=-1).reshape(1, 2 * H).astype(jnp.float32)
    w_a = w_a.astype(storage_dtype)
    w_b = w_b.astype(storage_dtype)

    # Tiny resident frequency row (f32 always — phase precision at large L).
    freq = jnp.exp(-math.log(max_len) * jnp.arange(H, dtype=jnp.float32) / H)
    freq2 = jnp.stack([freq, freq], axis=-1).reshape(1, 2 * H)

    # Row-tile over the sequence; keep it the full L or a multiple of 8, capped at 512.
    TL = L if L <= 512 else 512
    grid = (B, pl.cdiv(L, TL))

    itemsize = jnp.dtype(storage_dtype).itemsize
    x_blk = TL * 2 * D_in * itemsize
    o_blk = TL * 2 * H * itemsize
    resident = 2 * (2 * D_in) * (2 * H) * itemsize + 3 * (2 * H) * 4
    scratch_f32 = 4 * TL * 2 * H * 4            # pa/pb/cos/sin live f32 values
    vmem_limit = int(min(max(2 * (2 * (x_blk + o_blk) + resident + scratch_f32),
                             16 * 1024 * 1024),
                         48 * 1024 * 1024))

    flops = 2 * B * L * (2 * D_in) * (4 * H) + 4 * B * L * (2 * H)
    transcendentals = 2 * B * L * (2 * H)       # cos + sin generated in-kernel
    bytes_accessed = (itemsize * (B * L * 2 * D_in + B * L * 2 * H)   # x + out
                      + itemsize * 2 * (2 * D_in) * (2 * H)           # w_a + w_b
                      + 4 * 3 * (2 * H))                              # b_a + b_b + freq

    out_flat = pl.pallas_call(
        _pos_emb_kernel,
        grid=grid,
        in_specs=[
            pl.BlockSpec((None, TL, 2 * D_in), lambda b, l: (b, l, 0)),  # x tile
            pl.BlockSpec((2 * D_in, 2 * H),    lambda b, l: (0, 0)),     # w_a (resident)
            pl.BlockSpec((1, 2 * H),           lambda b, l: (0, 0)),     # b_a (resident)
            pl.BlockSpec((2 * D_in, 2 * H),    lambda b, l: (0, 0)),     # w_b (resident)
            pl.BlockSpec((1, 2 * H),           lambda b, l: (0, 0)),     # b_b (resident)
            pl.BlockSpec((1, 2 * H),           lambda b, l: (0, 0)),     # freq (resident)
        ],
        out_specs=pl.BlockSpec((None, TL, 2 * H), lambda b, l: (b, l, 0)),
        out_shape=jax.ShapeDtypeStruct((B, L, 2 * H), storage_dtype),
        compiler_params=pltpu.CompilerParams(
            dimension_semantics=("parallel", "parallel"),
            vmem_limit_bytes=vmem_limit),
        cost_estimate=pl.CostEstimate(
            flops=flops, transcendentals=transcendentals,
            bytes_accessed=bytes_accessed),
    )(x2, w_a, b_a, w_b, b_b, freq2)

    # Columns are already (r, i) interleaved -> this reshape is a free view.
    return out_flat.reshape(B, L, H, 2)


def _build_embedding(max_len, hidden_dim):
    steps = jnp.arange(max_len, dtype=jnp.float32)[:, None]
    dims = jnp.arange(hidden_dim, dtype=jnp.float32)[None, :]
    table = steps * jnp.exp(-math.log(max_len) * dims / hidden_dim)
    return jnp.cos(table), jnp.sin(table)


def _reference(x, w_real, b_real, w_imag, b_imag, max_len, hidden_dim):
    xr, xi = x[..., 0], x[..., 1]
    rl = lambda v: v @ w_real.T + b_real
    il = lambda v: v @ w_imag.T + b_imag
    pr = rl(xr) - il(xi)
    pi = rl(xi) + il(xr)
    cos, sin = _build_embedding(max_len, hidden_dim)
    out_r = pr * cos[None] - pi * sin[None]
    out_i = pr * sin[None] + pi * cos[None]
    return jnp.stack([out_r, out_i], axis=-1)


def _xavier_uniform(key, fan_out, fan_in):
    bound = math.sqrt(6.0 / (fan_in + fan_out))
    return jax.random.uniform(key, (fan_out, fan_in), jnp.float32, -bound, bound)


if __name__ == "__main__":
    # H=64 keeps the output block lane-dense (2*H = 128).
    max_len, input_dim, hidden_dim = 16, 4, 64
    B = 2

    key = jax.random.PRNGKey(0)
    k_x, k_wr, k_wi, k_br, k_bi = jax.random.split(key, 5)

    x = jax.random.normal(k_x, (B, max_len, input_dim, 2), jnp.float32)

    # Deterministic xavier_uniform init (torch nn.Linear layout [out, in]).
    # Module init zeroes the biases; use small non-zero biases here to exercise
    # the fused-bias path (forward math is identical).
    w_real = _xavier_uniform(k_wr, hidden_dim, input_dim)
    w_imag = _xavier_uniform(k_wi, hidden_dim, input_dim)
    b_real = 0.1 * jax.random.normal(k_br, (hidden_dim,), jnp.float32)
    b_imag = 0.1 * jax.random.normal(k_bi, (hidden_dim,), jnp.float32)

    ref = _reference(x, w_real, b_real, w_imag, b_imag, max_len, hidden_dim)

    # f32 storage path.
    out = position_embedding(x, w_real, b_real, w_imag, b_imag, max_len, hidden_dim)
    out = jax.block_until_ready(out)
    assert out.shape == (B, max_len, hidden_dim, 2)
    assert jnp.allclose(out, ref, atol=2e-5, rtol=1e-5)

    # bf16 storage path (halves HBM bytes; accumulation + phase stay f32).
    out_bf16 = position_embedding(x, w_real, b_real, w_imag, b_imag, max_len,
                                  hidden_dim, storage_dtype=jnp.bfloat16)
    out_bf16 = jax.block_until_ready(out_bf16)
    assert jnp.allclose(out_bf16.astype(jnp.float32), ref, atol=5e-2, rtol=5e-2)

    print("KERNEL_OK")
</pallas_src>

<mosaic_0001>
module attributes {stable_mosaic.version = 11 : i64} {
  func.func @_pos_emb_kernel(%arg0: i32, %arg1: i32, %arg2: memref<1x16x8xf32, #tpu.memory_space<vmem>>, %arg3: memref<8x128xf32, #tpu.memory_space<vmem>>, %arg4: memref<1x128xf32, #tpu.memory_space<vmem>>, %arg5: memref<8x128xf32, #tpu.memory_space<vmem>>, %arg6: memref<1x128xf32, #tpu.memory_space<vmem>>, %arg7: memref<1x128xf32, #tpu.memory_space<vmem>>, %arg8: memref<1x16x128xf32, #tpu.memory_space<vmem>>) attributes {dimension_semantics = [#tpu.dimension_semantics<parallel>, #tpu.dimension_semantics<parallel>], iteration_bounds = array<i64: 2, 1>, scalar_prefetch = 0 : i64, scratch_operands = 0 : i64, tpu.core_type = #tpu.core_type<tc>, window_params = [{transform_indices = @transform_0, window_bounds = array<i64: 1, 16, 8>}, {pipeline_mode = #tpu.pipeline_mode<synchronous>, transform_indices = @transform_1, window_bounds = array<i64: 8, 128>}, {pipeline_mode = #tpu.pipeline_mode<synchronous>, transform_indices = @transform_2, window_bounds = array<i64: 1, 128>}, {pipeline_mode = #tpu.pipeline_mode<synchronous>, transform_indices = @transform_3, window_bounds = array<i64: 8, 128>}, {pipeline_mode = #tpu.pipeline_mode<synchronous>, transform_indices = @transform_4, window_bounds = array<i64: 1, 128>}, {pipeline_mode = #tpu.pipeline_mode<synchronous>, transform_indices = @transform_5, window_bounds = array<i64: 1, 128>}, {transform_indices = @transform_6, window_bounds = array<i64: 1, 16, 128>}]} {
    %c0 = arith.constant 0 : index
    %c0_0 = arith.constant 0 : index
    %c0_1 = arith.constant 0 : index
    %0 = vector.load %arg2[%c0, %c0_0, %c0_1] : memref<1x16x8xf32, #tpu.memory_space<vmem>>, vector<1x16x8xf32>
    %1 = vector.shape_cast %0 : vector<1x16x8xf32> to vector<16x8xf32>
    %c0_2 = arith.constant 0 : index
    %c0_3 = arith.constant 0 : index
    %2 = vector.load %arg3[%c0_2, %c0_3] : memref<8x128xf32, #tpu.memory_space<vmem>>, vector<8x128xf32>
    %cst = arith.constant dense<0.000000e+00> : vector<16x128xf32>
    %3 = tpu.matmul %1, %2, %cst {dimension_numbers = #tpu.dot_dimension_numbers<[1], [0], [0], [1], [0, 0, 1, 1], [], []>} : vector<16x8xf32>, vector<8x128xf32>, vector<16x128xf32> -> vector<16x128xf32>
    %c0_4 = arith.constant 0 : index
    %c0_5 = arith.constant 0 : index
    %4 = vector.load %arg4[%c0_4, %c0_5] : memref<1x128xf32, #tpu.memory_space<vmem>>, vector<1x128xf32>
    %5 = vector.broadcast %4 : vector<1x128xf32> to vector<16x128xf32>
    %6 = arith.addf %3, %5 : vector<16x128xf32>
    %c0_6 = arith.constant 0 : index
    %c0_7 = arith.constant 0 : index
    %7 = vector.load %arg5[%c0_6, %c0_7] : memref<8x128xf32, #tpu.memory_space<vmem>>, vector<8x128xf32>
    %cst_8 = arith.constant dense<0.000000e+00> : vector<16x128xf32>
    %8 = tpu.matmul %1, %7, %cst_8 {dimension_numbers = #tpu.dot_dimension_numbers<[1], [0], [0], [1], [0, 0, 1, 1], [], []>} : vector<16x8xf32>, vector<8x128xf32>, vector<16x128xf32> -> vector<16x128xf32>
    %c0_9 = arith.constant 0 : index
    %c0_10 = arith.constant 0 : index
    %9 = vector.load %arg6[%c0_9, %c0_10] : memref<1x128xf32, #tpu.memory_space<vmem>>, vector<1x128xf32>
    %10 = vector.broadcast %9 : vector<1x128xf32> to vector<16x128xf32>
    %11 = arith.addf %8, %10 : vector<16x128xf32>
    %12 = tpu.iota {dimensions = array<i32: 0>} : vector<16x1xi32>
    %c16_i32 = arith.constant 16 : i32
    %13 = arith.muli %arg1, %c16_i32 : i32
    %14 = vector.broadcast %13 : i32 to vector<16x1xi32>
    %15 = arith.addi %14, %12 : vector<16x1xi32>
    %16 = arith.sitofp %15 : vector<16x1xi32> to vector<16x1xf32>
    %c0_11 = arith.constant 0 : index
    %c0_12 = arith.constant 0 : index
    %17 = vector.load %arg7[%c0_11, %c0_12] : memref<1x128xf32, #tpu.memory_space<vmem>>, vector<1x128xf32>
    %18 = vector.broadcast %16 : vector<16x1xf32> to vector<16x128xf32>
    %19 = vector.broadcast %17 : vector<1x128xf32> to vector<16x128xf32>
    %20 = arith.mulf %18, %19 : vector<16x128xf32>
    %21 = math.cos %20 : vector<16x128xf32>
    %22 = arith.mulf %6, %21 : vector<16x128xf32>
    %23 = math.sin %20 : vector<16x128xf32>
    %24 = arith.mulf %11, %23 : vector<16x128xf32>
    %25 = arith.addf %22, %24 : vector<16x128xf32>
    %c0_13 = arith.constant 0 : index
    %c0_14 = arith.constant 0 : index
    %c0_15 = arith.constant 0 : index
    %26 = vector.load %arg8[%c0_13, %c0_14, %c0_15] : memref<1x16x128xf32, #tpu.memory_space<vmem>>, vector<1x16x128xf32>
    %27 = vector.shape_cast %26 : vector<1x16x128xf32> to vector<16x128xf32>
    %28 = vector.shape_cast %25 : vector<16x128xf32> to vector<1x16x128xf32>
    tpu.vector_store %arg8[%c0_13, %c0_14, %c0_15], %28 {strides = array<i32>} : memref<1x16x128xf32, #tpu.memory_space<vmem>>, vector<1x16x128xf32>,
    return
  }
  func.func @transform_0(%arg0: i32, %arg1: i32) -> (i32, i32, i32) {
    %c0_i32 = arith.constant 0 : i32
    %c0_i32_0 = arith.constant 0 : i32
    return %arg0, %arg1, %c0_i32 : i32, i32, i32
  }
  func.func @transform_1(%arg0: i32, %arg1: i32) -> (i32, i32) {
    %c0_i32 = arith.constant 0 : i32
    %c0_i32_0 = arith.constant 0 : i32
    %c0_i32_1 = arith.constant 0 : i32
    return %c0_i32, %c0_i32_0 : i32, i32
  }
  func.func @transform_2(%arg0: i32, %arg1: i32) -> (i32, i32) {
    %c0_i32 = arith.constant 0 : i32
    %c0_i32_0 = arith.constant 0 : i32
    %c0_i32_1 = arith.constant 0 : i32
    return %c0_i32, %c0_i32_0 : i32, i32
  }
  func.func @transform_3(%arg0: i32, %arg1: i32) -> (i32, i32) {
    %c0_i32 = arith.constant 0 : i32
    %c0_i32_0 = arith.constant 0 : i32
    %c0_i32_1 = arith.constant 0 : i32
    return %c0_i32, %c0_i32_0 : i32, i32
  }
  func.func @transform_4(%arg0: i32, %arg1: i32) -> (i32, i32) {
    %c0_i32 = arith.constant 0 : i32
    %c0_i32_0 = arith.constant 0 : i32
    %c0_i32_1 = arith.constant 0 : i32
    return %c0_i32, %c0_i32_0 : i32, i32
  }
  func.func @transform_5(%arg0: i32, %arg1: i32) -> (i32, i32) {
    %c0_i32 = arith.constant 0 : i32
    %c0_i32_0 = arith.constant 0 : i32
    %c0_i32_1 = arith.constant 0 : i32
    return %c0_i32, %c0_i32_0 : i32, i32
  }
  func.func @transform_6(%arg0: i32, %arg1: i32) -> (i32, i32, i32) {
    %c0_i32 = arith.constant 0 : i32
    %c0_i32_0 = arith.constant 0 : i32
    return %arg0, %arg1, %c0_i32 : i32, i32, i32
  }
}

</mosaic_0001>

<llo_original>
// kernel: tpu_custom_call.1
$region0: #{tpu_custom_call.1}
  #allocation0 [shape = 'u32[]', space=smem, size = 0x4, offset = 0x4, fixed_abs, tag = 'smem constant byte address 0x4 - core index']
  #allocation1 [shape = 'u32[72,128]{1,0:T(1,128)}', space=vmem, size = 0x9000, scoped, tag = 'internal scratch']
  %s0 = inlined_call_operand.vmem [shape: f32[2,16,8], index: 0, kind: input, shape index: {}]
  %s1 = inlined_call_operand.vmem [shape: f32[8,128], index: 1, kind: input, shape index: {}]
  %s2 = inlined_call_operand.vmem [shape: f32[1,128], index: 2, kind: input, shape index: {}]
  %s3 = inlined_call_operand.vmem [shape: f32[8,128], index: 3, kind: input, shape index: {}]
  %s4 = inlined_call_operand.vmem [shape: f32[1,128], index: 4, kind: input, shape index: {}]
  %s5 = inlined_call_operand.vmem [shape: f32[1,128], index: 5, kind: input, shape index: {}]
  %s6 = inlined_call_operand.hbm [shape: f32[2,16,128], index: 6, kind: output, shape index: {}]
  %s7 = sld [smem:[#allocation0]]
  $region57: #{tpu_custom_call.1} parent=0
    _
  %s9 = ssub.s32 1, %s7
  %s10 = scalar_select 0, %s9, %s7
  $region1: #{tpu_custom_call.1} parent=0
    #allocation2 [shape = 'u8[16384]{0}', space=vmem, size = 0x4000, scoped, tag = 'output window, operand 0']
    #allocation3 [shape = 's32[2]{0}', space=sflag, size = 0x8, scoped, tag = 'scoped memory for tpu_custom_call.1']
    %11 = vsyncpa [#allocation3], 0
    %s12 = scalar_lea.sflag [#allocation3], 1
    %13 = vsyncpa %s12, 0
    loop: start=0, step=1, limit=4
    $region2: #{tpu_custom_call.1} parent=1 // loop_pre_header
      _
    $region3: #{tpu_custom_call.1} parent=1 // loop_header
      %s15 = sphi 0, %s19
      %p16 = scmp.ge.s32.totalorder %s15, 4
      %s22 = sphi 0, %s34
      %s23 = sphi 0, %s30
      %s24 = sphi 0, %s22
      %s25 = sphi 0, %s23
      %s26 = sphi 0, %s24
      %s27 = sphi 0, %s25
      %s39 = sphi 0, %s41
      %s42 = sphi 0, %s39
      %s43 = sphi 0, %s42
      %s59 = sphi 0, %s43
      %s63 = sphi 0, %s63
      %s65 = sphi 0, %s63
      %s66 = sphi 0, %s65
      %s80 = sphi 0, %s66
      %s84 = sphi 0, %s84
      %s86 = sphi 0, %s84
      %s87 = sphi 0, %s86
      %s101 = sphi 0, %s87
      %s105 = sphi 0, %s105
      %s107 = sphi 0, %s105
      %s108 = sphi 0, %s107
      %s122 = sphi 0, %s108
      %s126 = sphi 0, %s126
      %s128 = sphi 0, %s126
      %s129 = sphi 0, %s128
      %s143 = sphi 0, %s129
      %s147 = sphi 0, %s147
      %s149 = sphi 0, %s147
      %s150 = sphi 0, %s149
      %s164 = sphi 0, %s150
      %s172 = sphi 0, %s174
      %s175 = sphi 0, %s172
      %s176 = sphi 0, %s175
      %s192 = sphi 0, %s176
    $region4: #{tpu_custom_call.1} parent=1 // loop_header_branch
      %18 = sbr.rel (%p16) target = $region8
    $region5: #{tpu_custom_call.1} parent=1 // loop_body
      %s20 = ssub.s32 %s15, 1
      %s21 = ssub.s32 %s15, 2
      %s28 = sadd.s32 1, %s23
      %p29 = scmp.ge.s32.totalorder %s28, 1
      %s30 = scalar_select %p29, 0, %s28
      %s31 = sadd.s32 1, %s22
      %s32 = scalar_select %p29, %s31, %s22
      %p33 = scmp.ge.s32.totalorder %s32, 2
      %s34 = scalar_select %p33, 0, %s32
      %s35 = ssub.s32 %s22, %s34
      %s36 = ssub.s32 %s23, %s30
      %s37 = sor.u32 %s35, %s36
      %p38 = scmp.eq.s32.totalorder %s37, 0
      %s40 = sadd.s32 %s39, 1
      %s41 = scalar_select %p38, %s39, %s40
      %p44 = pneg %p38
      %p45 = scmp.eq.s32.totalorder %s15, 1
      %p46 = por %p44, %p45
      %p47 = scmp.ne.s32.totalorder %s39, %s42
      %p48 = scmp.eq.s32.totalorder %s15, 0
      %p49 = por %p47, %p48
      %p50 = scmp.ne.s32.totalorder %s39, %s42
      %p51 = scmp.eq.s32.totalorder %s20, 1
      %p52 = por %p50, %p51
      %p53 = scmp.ne.s32.totalorder %s42, %s43
      %p54 = scmp.eq.s32.totalorder %s20, 0
      %p55 = por %p53, %p54
      %p56 = scmp.ne.s32.totalorder %s42, %s43
      %p57 = scmp.eq.s32.totalorder %s21, 1
      %p58 = por %p56, %p57
      %p60 = scmp.ne.s32.totalorder %s43, %s59
      %p61 = scmp.eq.s32.totalorder %s21, 0
      %p62 = por %p60, %p61
      %s64 = sadd.s32 %s63, 1
      %p67 = scmp.eq.s32.totalorder %s15, 1
      %p68 = scmp.ne.s32.totalorder %s63, %s65
      %p69 = scmp.eq.s32.totalorder %s15, 0
      %p70 = por %p68, %p69
      %p71 = scmp.ne.s32.totalorder %s63, %s65
      %p72 = scmp.eq.s32.totalorder %s20, 1
      %p73 = por %p71, %p72
      %p74 = scmp.ne.s32.totalorder %s65, %s66
      %p75 = scmp.eq.s32.totalorder %s20, 0
      %p76 = por %p74, %p75
      %p77 = scmp.ne.s32.totalorder %s65, %s66
      %p78 = scmp.eq.s32.totalorder %s21, 1
      %p79 = por %p77, %p78
      %p81 = scmp.ne.s32.totalorder %s66, %s80
      %p82 = scmp.eq.s32.totalorder %s21, 0
      %p83 = por %p81, %p82
      %s85 = sadd.s32 %s84, 1
      %p88 = scmp.eq.s32.totalorder %s15, 1
      %p89 = scmp.ne.s32.totalorder %s84, %s86
      %p90 = scmp.eq.s32.totalorder %s15, 0
      %p91 = por %p89, %p90
      %p92 = scmp.ne.s32.totalorder %s84, %s86
      %p93 = scmp.eq.s32.totalorder %s20, 1
      %p94 = por %p92, %p93
      %p95 = scmp.ne.s32.totalorder %s86, %s87
      %p96 = scmp.eq.s32.totalorder %s20, 0
      %p97 = por %p95, %p96
      %p98 = scmp.ne.s32.totalorder %s86, %s87
      %p99 = scmp.eq.s32.totalorder %s21, 1
      %p100 = por %p98, %p99
      %p102 = scmp.ne.s32.totalorder %s87, %s101
      %p103 = scmp.eq.s32.totalorder %s21, 0
      %p104 = por %p102, %p103
      %s106 = sadd.s32 %s105, 1
      %p109 = scmp.eq.s32.totalorder %s15, 1
      %p110 = scmp.ne.s32.totalorder %s105, %s107
      %p111 = scmp.eq.s32.totalorder %s15, 0
      %p112 = por %p110, %p111
      %p113 = scmp.ne.s32.totalorder %s105, %s107
      %p114 = scmp.eq.s32.totalorder %s20, 1
      %p115 = por %p113, %p114
      %p116 = scmp.ne.s32.totalorder %s107, %s108
      %p117 = scmp.eq.s32.totalorder %s20, 0
      %p118 = por %p116, %p117
      %p119 = scmp.ne.s32.totalorder %s107, %s108
      %p120 = scmp.eq.s32.totalorder %s21, 1
      %p121 = por %p119, %p120
      %p123 = scmp.ne.s32.totalorder %s108, %s122
      %p124 = scmp.eq.s32.totalorder %s21, 0
      %p125 = por %p123, %p124
      %s127 = sadd.s32 %s126, 1
      %p130 = scmp.eq.s32.totalorder %s15, 1
      %p131 = scmp.ne.s32.totalorder %s126, %s128
      %p132 = scmp.eq.s32.totalorder %s15, 0
      %p133 = por %p131, %p132
      %p134 = scmp.ne.s32.totalorder %s126, %s128
      %p135 = scmp.eq.s32.totalorder %s20, 1
      %p136 = por %p134, %p135
      %p137 = scmp.ne.s32.totalorder %s128, %s129
      %p138 = scmp.eq.s32.totalorder %s20, 0
      %p139 = por %p137, %p138
      %p140 = scmp.ne.s32.totalorder %s128, %s129
      %p141 = scmp.eq.s32.totalorder %s21, 1
      %p142 = por %p140, %p141
      %p144 = scmp.ne.s32.totalorder %s129, %s143
      %p145 = scmp.eq.s32.totalorder %s21, 0
      %p146 = por %p144, %p145
      %s148 = sadd.s32 %s147, 1
      %p151 = scmp.eq.s32.totalorder %s15, 1
      %p152 = scmp.ne.s32.totalorder %s147, %s149
      %p153 = scmp.eq.s32.totalorder %s15, 0
      %p154 = por %p152, %p153
      %p155 = scmp.ne.s32.totalorder %s147, %s149
      %p156 = scmp.eq.s32.totalorder %s20, 1
      %p157 = por %p155, %p156
      %p158 = scmp.ne.s32.totalorder %s149, %s150
      %p159 = scmp.eq.s32.totalorder %s20, 0
      %p160 = por %p158, %p159
      %p161 = scmp.ne.s32.totalorder %s149, %s150
      %p162 = scmp.eq.s32.totalorder %s21, 1
      %p163 = por %p161, %p162
      %p165 = scmp.ne.s32.totalorder %s150, %s164
      %p166 = scmp.eq.s32.totalorder %s21, 0
      %p167 = por %p165, %p166
      %s168 = ssub.s32 %s22, %s34
      %s169 = ssub.s32 %s23, %s30
      %s170 = sor.u32 %s168, %s169
      %p171 = scmp.eq.s32.totalorder %s170, 0
      %s173 = sadd.s32 %s172, 1
      %s174 = scalar_select %p171, %s172, %s173
      %p177 = pneg %p171
      %p178 = scmp.eq.s32.totalorder %s15, 1
      %p179 = por %p177, %p178
      %p180 = scmp.ne.s32.totalorder %s172, %s175
      %p181 = scmp.eq.s32.totalorder %s15, 0
      %p182 = por %p180, %p181
      %p183 = scmp.ne.s32.totalorder %s172, %s175
      %p184 = scmp.eq.s32.totalorder %s20, 1
      %p185 = por %p183, %p184
      %p186 = scmp.ne.s32.totalorder %s175, %s176
      %p187 = scmp.eq.s32.totalorder %s20, 0
      %p188 = por %p186, %p187
      %p189 = scmp.ne.s32.totalorder %s175, %s176
      %p190 = scmp.eq.s32.totalorder %s21, 1
      %p191 = por %p189, %p190
      %p193 = scmp.ne.s32.totalorder %s176, %s192
      %p194 = scmp.eq.s32.totalorder %s21, 0
      %p195 = por %p193, %p194
      %p196 = scmp.le.s32.totalorder 1, %s15
      %p197 = scmp.lt.s32.totalorder %s15, 3
      %p198 = pnand %p196, %p197
      %p199 = pneg %p198
      // Predicated region
      $region9: #{tpu_custom_call.1} parent=5 // pred_check
        _
      $region10: #{tpu_custom_call.1} parent=5 // pred_check_branch
        %201 = sbr.rel (%p198) target = $region12
      $region11: #{tpu_custom_call.1} parent=5 // pred_region
        %s202 = ssub.s32 %s15, 1
        // Predicated region
        $region13: #{tpu_custom_call.1} parent=11 // pred_check
          %p203 = pneg %p76
        $region14: #{tpu_custom_call.1} parent=11 // pred_check_branch
          %205 = sbr.rel (%p203) target = $region16
        $region15: #{tpu_custom_call.1} parent=11 // pred_region
          _
        $region16: #{tpu_custom_call.1} parent=11 // pred_fallthru
          _
        // Predicated region
        $region17: #{tpu_custom_call.1} parent=11 // pred_check
          %p206 = pneg %p97
        $region18: #{tpu_custom_call.1} parent=11 // pred_check_branch
          %208 = sbr.rel (%p206) target = $region20
        $region19: #{tpu_custom_call.1} parent=11 // pred_region
          _
        $region20: #{tpu_custom_call.1} parent=11 // pred_fallthru
          _
        // Predicated region
        $region21: #{tpu_custom_call.1} parent=11 // pred_check
          %p209 = pneg %p118
        $region22: #{tpu_custom_call.1} parent=11 // pred_check_branch
          %211 = sbr.rel (%p209) target = $region24
        $region23: #{tpu_custom_call.1} parent=11 // pred_region
          _
        $region24: #{tpu_custom_call.1} parent=11 // pred_fallthru
          _
        // Predicated region
        $region25: #{tpu_custom_call.1} parent=11 // pred_check
          %p212 = pneg %p139
        $region26: #{tpu_custom_call.1} parent=11 // pred_check_branch
          %214 = sbr.rel (%p212) target = $region28
        $region27: #{tpu_custom_call.1} parent=11 // pred_region
          _
        $region28: #{tpu_custom_call.1} parent=11 // pred_fallthru
          _
        // Predicated region
        $region29: #{tpu_custom_call.1} parent=11 // pred_check
          %p215 = pneg %p160
        $region30: #{tpu_custom_call.1} parent=11 // pred_check_branch
          %217 = sbr.rel (%p215) target = $region32
        $region31: #{tpu_custom_call.1} parent=11 // pred_region
          _
        $region32: #{tpu_custom_call.1} parent=11 // pred_fallthru
          _
      $region12: #{tpu_custom_call.1} parent=5 // pred_fallthru
        _
      %p218 = scmp.lt.s32.totalorder %s15, 2
      // Predicated region
      $region33: #{tpu_custom_call.1} parent=5 // pred_check
        %p219 = pneg %p218
      $region34: #{tpu_custom_call.1} parent=5 // pred_check_branch
        %221 = sbr.rel (%p219) target = $region36
      $region35: #{tpu_custom_call.1} parent=5 // pred_region
        // Predicated region
        $region37: #{tpu_custom_call.1} parent=35 // pred_check
          %p222 = pneg %p49
        $region38: #{tpu_custom_call.1} parent=35 // pred_check_branch
          %224 = sbr.rel (%p222) target = $region40
        $region39: #{tpu_custom_call.1} parent=35 // pred_region
          %s225 = smul.u32 2, %s23
          %p226 = scmp.lt.s32.totalorder %s22, 1
          %s227 = scalar_select %p226, %s22, 1
          %p228 = scmp.lt.s32.totalorder %s225, 1
          %s229 = scalar_select %p228, %s225, 1
          %s230 = smul.addr %s227, 2
          %s231 = sadd.s32 %s229, %s230
          %s232 = smul.addr %s231, 8
          %s233 = scalar_lea.vmem %s0, %s232
          %s234 = smul.u32 2, %s23
        $region40: #{tpu_custom_call.1} parent=35 // pred_fallthru
          _
      $region36: #{tpu_custom_call.1} parent=5 // pred_fallthru
        _
      %p235 = scmp.le.s32.totalorder 1, %s15
      %p236 = scmp.lt.s32.totalorder %s15, 3
      %p237 = pnand %p235, %p236
      %p238 = pneg %p237
      // Predicated region
      $region41: #{tpu_custom_call.1} parent=5 // pred_check
        _
      $region42: #{tpu_custom_call.1} parent=5 // pred_check_branch
        %240 = sbr.rel (%p237) target = $region44
      $region43: #{tpu_custom_call.1} parent=5 // pred_region
        %s241 = ssub.s32 %s15, 1
        %s242 = smul.u32 2, %s25
        %p243 = scmp.lt.s32.totalorder %s24, 1
        %s244 = scalar_select %p243, %s24, 1
        %p245 = scmp.lt.s32.totalorder %s242, 1
        %s246 = scalar_select %p245, %s242, 1
        %s247 = smul.addr %s244, 2
        %s248 = sadd.s32 %s246, %s247
        %s249 = smul.addr %s248, 8
        %s250 = scalar_lea.vmem %s0, %s249
        %p251 = pneg %p55
        %p252 = pneg %p52
        %p253 = pneg %p76
        %p254 = pneg %p73
        %p255 = pneg %p97
        %p256 = pneg %p94
        %p257 = pneg %p118
        %p258 = pneg %p115
        %p259 = pneg %p139
        %p260 = pneg %p136
        %p261 = pneg %p160
        %p262 = pneg %p157
        %p263 = pneg %p188
        %p264 = pneg %p185
        %s265 = sand.u32 %s175, 1
        %s266 = scalar_lea.sflag [#allocation3], %s265
        %s267 = sand.u32 %s175, 1
        %s268 = smul.addr %s267, 16
        %s269 = scalar_lea.vmem [#allocation2], %s268
        %s270 = smul.u32 2, %s25
        %p271 = scmp.lt.s32.totalorder %s24, 1
        %s272 = scalar_select %p271, %s24, 1
        %p273 = scmp.lt.s32.totalorder %s270, 1
        %s274 = scalar_select %p273, %s270, 1
        %s275 = smul.addr %s272, 2
        %s276 = sadd.s32 %s274, %s275
        %s277 = smul.addr %s276, 8
        %s278 = scalar_lea.vmem %s0, %s277
        %s279 = smul.u32 2, %s25
        %s280 = smul.u32 2, %s25
        %v281 = vld [vmem:[%s278] sm:$0xff]
        %v282 = vld [vmem:[%s278 + $0x8] sm:$0xff]
        %v283 = vld [vmem:[%s1] sm:$0xff]
        %v284 = vld [vmem:[%s2] sm:$0x1]
        %v286 = vperm.slane %v284, 0
        %vm288 = vcmask 64512
        %v290 = vsel %vm288, %v281, 0
        %v293 = vsel %vm288, %v282, 0
        %295 = vmatpush.msra.mxu0 0.0
        %296 = vmatpush.msra.mxu0 0.0
        %297 = vmatpush.msra.mxu0 0.0
        %298 = vmatpush.msra.mxu0 0.0
        %299 = vmatpush.msra.mxu0 0.0
        %300 = vmatpush.msra.mxu0 0.0
        %301 = vmatpush.msra.mxu0 0.0
        %302 = vmatpush.msra.mxu0 0.0
        %303 = vmatpush.msra.mxu0 0.0
        %304 = vmatpush.msra.mxu0 0.0
        %305 = vmatpush.msra.mxu0 0.0
        %306 = vmatpush.msra.mxu0 0.0
        %307 = vmatpush.msra.mxu0 0.0
        %308 = vmatpush.msra.mxu0 0.0
        %309 = vmatpush.msra.mxu0 0.0
        %310 = vmatpush.msra.mxu0 %v283
        %311 = vmatmul.f32.gmra.mxu0 %v290
        %v312 = vpop.f32.mrf.mxu0
        %v313 = vadd.f32 %v286, %v312
        %314 = vmatmul.f32.gmra.mxu0 %v293
        %v315 = vpop.f32.mrf.mxu0
        %v316 = vadd.f32 %v286, %v315
        %317 = vdwg.mxu0
        %v318 = vld [vmem:[%s3] sm:$0xff]
        %v319 = vld [vmem:[%s4] sm:$0x1]
        %v321 = vperm.slane %v319, 0
        %323 = vmatpush.msra.mxu0 0.0
        %324 = vmatpush.msra.mxu0 0.0
        %325 = vmatpush.msra.mxu0 0.0
        %326 = vmatpush.msra.mxu0 0.0
        %327 = vmatpush.msra.mxu0 0.0
        %328 = vmatpush.msra.mxu0 0.0
        %329 = vmatpush.msra.mxu0 0.0
        %330 = vmatpush.msra.mxu0 0.0
        %331 = vmatpush.msra.mxu0 0.0
        %332 = vmatpush.msra.mxu0 0.0
        %333 = vmatpush.msra.mxu0 0.0
        %334 = vmatpush.msra.mxu0 0.0
        %335 = vmatpush.msra.mxu0 0.0
        %336 = vmatpush.msra.mxu0 0.0
        %337 = vmatpush.msra.mxu0 0.0
        %338 = vmatpush.msra.mxu0 %v318
        %339 = vmatmul.f32.gmra.mxu0 %v290
        %v340 = vpop.f32.mrf.mxu0
        %v341 = vadd.f32 %v321, %v340
        %342 = vmatmul.f32.gmra.mxu0 %v293
        %v343 = vpop.f32.mrf.mxu0
        %v344 = vadd.f32 %v321, %v343
        %345 = vdwg.mxu0
        %v346 = vlaneseq
        %v347 = vshrl.u32 %v346, 7
        %v348 = vadd.s32 %v347, 8
        %s349 = smul.u32 %s25, 16
        %v350 = vstv %s349
        %v351 = vadd.s32 %v350, %v347
        %v352 = vadd.s32 %v350, %v348
        %v353 = vcvt.s32.f32 %v351
        %v354 = vcvt.s32.f32 %v352
        %v355 = vld [vmem:[%s5] sm:$0x1]
        %v357 = vperm.slane %v355, 0
        %v359 = vmul.f32 %v353, %v357
        %v360 = vmul.f32 %v354, %v357
        %v361 = vand.u32 2147483647, %v359
        %vm362 = vcmp.le.f32.partialorder %v361, 0.7853982
        %vm363 = vcmp.lt.s32.totalorder %v359, 0
        %v364 = vand.u32 %v359, 2139095040
        %v365 = vshrl.u32 %v364, 23
        %v366 = vsub.s32 %v365, 127
        %v367 = vand.u32 2147483647, %v359
        %v368 = vand.u32 %v367, 8388607
        %v369 = vor.u32 %v368, 8388608
        %v370 = vsub.s32 0, %v369
        %v371 = vadd.s32 %v366, 1
        %vm372 = vcmp.gt.s32.totalorder %v371, 0
        %v373 = vsel %vm372, %v371, 0
        %v374 = vshrl.u32 %v373, 5
        %v375 = vand.u32 %v373, 31
        %v376 = vsub.s32 32, %v375
        %v377 = vshrl.u32 683565275, %v376
        %v378 = vshll.u32 683565275, %v375
        %v379 = vshrl.u32 2475754826, %v376
        %v380 = vor.u32 %v378, %v379
        %v381 = vshll.u32 2475754826, %v375
        %v382 = vshrl.u32 2131351028, %v376
        %v383 = vor.u32 %v381, %v382
        %v384 = vshll.u32 2131351028, %v375
        %v385 = vshrl.u32 2102212464, %v376
        %v386 = vor.u32 %v384, %v385
        %v387 = vshll.u32 2102212464, %v375
        %v388 = vshrl.u32 920167782, %v376
        %v389 = vor.u32 %v387, %v388
        %v390 = vshll.u32 920167782, %v375
        %v391 = vshrl.u32 1326507024, %v376
        %v392 = vor.u32 %v390, %v391
        %vm393 = vcmp.lt.s32.totalorder %v374, 1
        %vm394 = vcmp.lt.s32.totalorder %v374, 2
        %vm395 = vcmp.lt.s32.totalorder %v374, 3
        %vm396 = vcmp.lt.s32.totalorder %v374, 4
        %v397 = vsel %vm393, %v377, %v380
        %v398 = vsel %vm396, %v386, 2102212464
        %v399 = vsel %vm395, %v383, %v398
        %v400 = vsel %vm394, %v397, %v399
        %v401 = vsel %vm393, %v380, %v383
        %v402 = vsel %vm396, %v389, 920167782
        %v403 = vsel %vm395, %v386, %v402
        %v404 = vsel %vm394, %v401, %v403
        %v405 = vsel %vm393, %v383, %v386
        %v406 = vsel %vm396, %v392, 1326507024
        %v407 = vsel %vm395, %v389, %v406
        %v408 = vsel %vm394, %v405, %v407
        %v409 = vshll.u32 %v369, 8
        %v410 = vand.u32 %v409, 65535
        %v411 = vshrl.u32 %v409, 16
        %v412 = vand.u32 %v408, 65535
        %v413 = vshrl.u32 %v408, 16
        %v414 = vmul.u32 %v410, %v412
        %v415 = vmul.u32 %v410, %v413
        %v416 = vmul.u32 %v411, %v412
        %v417 = vmul.u32 %v411, %v413
        %v418 = vshll.u32 %v415, 16
        %v419 = vshrl.u32 %v415, 16
        %v420 = vshll.u32 %v416, 16
        %v421 = vshrl.u32 %v416, 16
        %vm422 = vc.u32 %v414, %v418
        %v423 = vsel %vm422, 1, 0
        %v424 = vadd.s32 %v414, %v418
        %v425 = vadd.s32 %v417, %v423
        %vm426 = vc.u32 %v424, %v420
        %v427 = vsel %vm426, 1, 0
        %v428 = vadd.s32 %v424, %v420
        %v429 = vadd.s32 %v425, %v427
        %v430 = vadd.s32 %v429, %v419
        %v431 = vadd.s32 %v430, %v421
        %v432 = vand.u32 %v409, 65535
        %v433 = vshrl.u32 %v409, 16
        %v434 = vand.u32 %v404, 65535
        %v435 = vshrl.u32 %v404, 16
        %v436 = vmul.u32 %v432, %v434
        %v437 = vmul.u32 %v432, %v435
        %v438 = vmul.u32 %v433, %v434
        %v439 = vmul.u32 %v433, %v435
        %v440 = vshll.u32 %v437, 16
        %v441 = vshrl.u32 %v437, 16
        %v442 = vshll.u32 %v438, 16
        %v443 = vshrl.u32 %v438, 16
        %vm444 = vc.u32 %v436, %v440
        %v445 = vsel %vm444, 1, 0
        %v446 = vadd.s32 %v436, %v440
        %v447 = vadd.s32 %v439, %v445
        %vm448 = vc.u32 %v446, %v442
        %v449 = vsel %vm448, 1, 0
        %v450 = vadd.s32 %v446, %v442
        %v451 = vadd.s32 %v447, %v449
        %v452 = vadd.s32 %v451, %v441
        %v453 = vadd.s32 %v452, %v443
        %v454 = vmul.u32 %v409, %v400
        %v455 = vadd.s32 %v431, %v450
        %vm456 = vc.u32 %v431, %v450
        %v457 = vadd.s32 %v453, 1
        %v458 = vsel %vm456, %v457, %v453
        %v459 = vadd.s32 %v454, %v458
        %v460 = vadd.s32 %v459, 536870912
        %v461 = vshrl.u32 %v460, 30
        %v462 = vshll.u32 %v461, 30
        %v463 = vsub.s32 %v459, %v462
        %vm464 = vcmp.lt.s32.totalorder %v463, 0
        %v465 = vsub.s32 0, %v463
        %v466 = vsel %vm464, %v465, %v463
        %v467 = vclz %v466
        %v468 = vsub.s32 %v467, 2
        %vm469 = vcmp.gt.s32.totalorder 0, %v468
        %v470 = vsel %vm469, 0, %v468
        %v471 = vsub.s32 32, %v470
        %v472 = vshll.u32 %v463, %v470
        %v473 = vshrl.u32 %v455, %v471
        %v474 = vor.u32 %v472, %v473
        %v475 = vsub.s32 4294967266, %v470
        %v476 = vadd.s32 %v475, 127
        %v477 = vshll.u32 %v476, 23
        %v478 = vor.u32 4788187, %v477
        %v479 = vand.u32 2147483647, %v478
        %v481 = vcvt.s32.f32 %v474
        %v482 = vmul.f32 %v481, %v479
        %v483 = vxor.u32 %v482, 2147483648
        %v484 = vsel %vm363, %v483, %v482
        %v485 = vsub.s32 4, %v461
        %v486 = vsel %vm363, %v485, %v461
        %v487 = vsel %vm362, %v359, %v484
        %v488 = vsel %vm362, 0, %v486
        %v489 = vmul.f32 %v487, %v487
        %v490 = vmul.f32 %v489, -0.001358992
        %v491 = vadd.f32 %v490, 0.041655596
        %v492 = vmul.f32 %v489, %v491
        %v493 = vadd.f32 %v492, -0.4999988
        %v494 = vmul.f32 %v489, %v493
        %v495 = vadd.f32 1.0, %v494
        %v496 = vmul.f32 %v487, %v487
        %v497 = vmul.f32 %v496, -0.00019511016
        %v498 = vadd.f32 %v497, 0.008332121
        %v499 = vmul.f32 %v496, %v498
        %v500 = vadd.f32 %v499, -0.16666654
        %v501 = vmul.f32 %v496, %v500
        %v502 = vadd.f32 %v501, 1.0
        %v503 = vmul.f32 %v502, %v487
        %vm504 = vweird.f32 %v359
        %v505 = vand.u32 %v488, 3
        %vm506 = vcmp.lt.s32.totalorder %v505, 2
        %vm507 = vcmp.eq.s32.totalorder %v505, 0
        %v508 = vxor.u32 %v503, 2147483648
        %v509 = vsel %vm507, %v495, %v508
        %vm510 = vcmp.eq.s32.totalorder %v505, 2
        %v511 = vxor.u32 %v495, 2147483648
        %v512 = vsel %vm510, %v511, %v503
        %v513 = vsel %vm506, %v509, %v512
        %v514 = vsel %vm504, nan, %v513
        %v515 = vand.u32 2147483647, %v360
        %vm516 = vcmp.le.f32.partialorder %v515, 0.7853982
        %vm517 = vcmp.lt.s32.totalorder %v360, 0
        %v518 = vand.u32 %v360, 2139095040
        %v519 = vshrl.u32 %v518, 23
        %v520 = vsub.s32 %v519, 127
        %v521 = vand.u32 2147483647, %v360
        %v522 = vand.u32 %v521, 8388607
        %v523 = vor.u32 %v522, 8388608
        %v524 = vsub.s32 0, %v523
        %v525 = vadd.s32 %v520, 1
        %vm526 = vcmp.gt.s32.totalorder %v525, 0
        %v527 = vsel %vm526, %v525, 0
        %v528 = vshrl.u32 %v527, 5
        %v529 = vand.u32 %v527, 31
        %v530 = vsub.s32 32, %v529
        %v531 = vshrl.u32 683565275, %v530
        %v532 = vshll.u32 683565275, %v529
        %v533 = vshrl.u32 2475754826, %v530
        %v534 = vor.u32 %v532, %v533
        %v535 = vshll.u32 2475754826, %v529
        %v536 = vshrl.u32 2131351028, %v530
        %v537 = vor.u32 %v535, %v536
        %v538 = vshll.u32 2131351028, %v529
        %v539 = vshrl.u32 2102212464, %v530
        %v540 = vor.u32 %v538, %v539
        %v541 = vshll.u32 2102212464, %v529
        %v542 = vshrl.u32 920167782, %v530
        %v543 = vor.u32 %v541, %v542
        %v544 = vshll.u32 920167782, %v529
        %v545 = vshrl.u32 1326507024, %v530
        %v546 = vor.u32 %v544, %v545
        %vm547 = vcmp.lt.s32.totalorder %v528, 1
        %vm548 = vcmp.lt.s32.totalorder %v528, 2
        %vm549 = vcmp.lt.s32.totalorder %v528, 3
        %vm550 = vcmp.lt.s32.totalorder %v528, 4
        %v551 = vsel %vm547, %v531, %v534
        %v552 = vsel %vm550, %v540, 2102212464
        %v553 = vsel %vm549, %v537, %v552
        %v554 = vsel %vm548, %v551, %v553
        %v555 = vsel %vm547, %v534, %v537
        %v556 = vsel %vm550, %v543, 920167782
        %v557 = vsel %vm549, %v540, %v556
        %v558 = vsel %vm548, %v555, %v557
        %v559 = vsel %vm547, %v537, %v540
        %v560 = vsel %vm550, %v546, 1326507024
        %v561 = vsel %vm549, %v543, %v560
        %v562 = vsel %vm548, %v559, %v561
        %v563 = vshll.u32 %v523, 8
        %v564 = vand.u32 %v563, 65535
        %v565 = vshrl.u32 %v563, 16
        %v566 = vand.u32 %v562, 65535
        %v567 = vshrl.u32 %v562, 16
        %v568 = vmul.u32 %v564, %v566
        %v569 = vmul.u32 %v564, %v567
        %v570 = vmul.u32 %v565, %v566
        %v571 = vmul.u32 %v565, %v567
        %v572 = vshll.u32 %v569, 16
        %v573 = vshrl.u32 %v569, 16
        %v574 = vshll.u32 %v570, 16
        %v575 = vshrl.u32 %v570, 16
        %vm576 = vc.u32 %v568, %v572
        %v577 = vsel %vm576, 1, 0
        %v578 = vadd.s32 %v568, %v572
        %v579 = vadd.s32 %v571, %v577
        %vm580 = vc.u32 %v578, %v574
        %v581 = vsel %vm580, 1, 0
        %v582 = vadd.s32 %v578, %v574
        %v583 = vadd.s32 %v579, %v581
        %v584 = vadd.s32 %v583, %v573
        %v585 = vadd.s32 %v584, %v575
        %v586 = vand.u32 %v563, 65535
        %v587 = vshrl.u32 %v563, 16
        %v588 = vand.u32 %v558, 65535
        %v589 = vshrl.u32 %v558, 16
        %v590 = vmul.u32 %v586, %v588
        %v591 = vmul.u32 %v586, %v589
        %v592 = vmul.u32 %v587, %v588
        %v593 = vmul.u32 %v587, %v589
        %v594 = vshll.u32 %v591, 16
        %v595 = vshrl.u32 %v591, 16
        %v596 = vshll.u32 %v592, 16
        %v597 = vshrl.u32 %v592, 16
        %vm598 = vc.u32 %v590, %v594
        %v599 = vsel %vm598, 1, 0
        %v600 = vadd.s32 %v590, %v594
        %v601 = vadd.s32 %v593, %v599
        %vm602 = vc.u32 %v600, %v596
        %v603 = vsel %vm602, 1, 0
        %v604 = vadd.s32 %v600, %v596
        %v605 = vadd.s32 %v601, %v603
        %v606 = vadd.s32 %v605, %v595
        %v607 = vadd.s32 %v606, %v597
        %v608 = vmul.u32 %v563, %v554
        %v609 = vadd.s32 %v585, %v604
        %vm610 = vc.u32 %v585, %v604
        %v611 = vadd.s32 %v607, 1
        %v612 = vsel %vm610, %v611, %v607
        %v613 = vadd.s32 %v608, %v612
        %v614 = vadd.s32 %v613, 536870912
        %v615 = vshrl.u32 %v614, 30
        %v616 = vshll.u32 %v615, 30
        %v617 = vsub.s32 %v613, %v616
        %vm618 = vcmp.lt.s32.totalorder %v617, 0
        %v619 = vsub.s32 0, %v617
        %v620 = vsel %vm618, %v619, %v617
        %v621 = vclz %v620
        %v622 = vsub.s32 %v621, 2
        %vm623 = vcmp.gt.s32.totalorder 0, %v622
        %v624 = vsel %vm623, 0, %v622
        %v625 = vsub.s32 32, %v624
        %v626 = vshll.u32 %v617, %v624
        %v627 = vshrl.u32 %v609, %v625
        %v628 = vor.u32 %v626, %v627
        %v629 = vsub.s32 4294967266, %v624
        %v630 = vadd.s32 %v629, 127
        %v631 = vshll.u32 %v630, 23
        %v632 = vor.u32 4788187, %v631
        %v633 = vand.u32 2147483647, %v632
        %v635 = vcvt.s32.f32 %v628
        %v636 = vmul.f32 %v635, %v633
        %v637 = vxor.u32 %v636, 2147483648
        %v638 = vsel %vm517, %v637, %v636
        %v639 = vsub.s32 4, %v615
        %v640 = vsel %vm517, %v639, %v615
        %v641 = vsel %vm516, %v360, %v638
        %v642 = vsel %vm516, 0, %v640
        %v643 = vmul.f32 %v641, %v641
        %v644 = vmul.f32 %v643, -0.001358992
        %v645 = vadd.f32 %v644, 0.041655596
        %v646 = vmul.f32 %v643, %v645
        %v647 = vadd.f32 %v646, -0.4999988
        %v648 = vmul.f32 %v643, %v647
        %v649 = vadd.f32 1.0, %v648
        %v650 = vmul.f32 %v641, %v641
        %v651 = vmul.f32 %v650, -0.00019511016
        %v652 = vadd.f32 %v651, 0.008332121
        %v653 = vmul.f32 %v650, %v652
        %v654 = vadd.f32 %v653, -0.16666654
        %v655 = vmul.f32 %v650, %v654
        %v656 = vadd.f32 %v655, 1.0
        %v657 = vmul.f32 %v656, %v641
        %vm658 = vweird.f32 %v360
        %v659 = vand.u32 %v642, 3
        %vm660 = vcmp.lt.s32.totalorder %v659, 2
        %vm661 = vcmp.eq.s32.totalorder %v659, 0
        %v662 = vxor.u32 %v657, 2147483648
        %v663 = vsel %vm661, %v649, %v662
        %vm664 = vcmp.eq.s32.totalorder %v659, 2
        %v665 = vxor.u32 %v649, 2147483648
        %v666 = vsel %vm664, %v665, %v657
        %v667 = vsel %vm660, %v663, %v666
        %v668 = vsel %vm658, nan, %v667
        %v669 = vmul.f32 %v313, %v514
        %v670 = vmul.f32 %v316, %v668
        %v671 = vand.u32 2147483647, %v359
        %vm672 = vcmp.le.f32.partialorder %v671, 0.7853982
        %vm673 = vcmp.lt.s32.totalorder %v359, 0
        %v674 = vand.u32 %v359, 2139095040
        %v675 = vshrl.u32 %v674, 23
        %v676 = vsub.s32 %v675, 127
        %v677 = vand.u32 2147483647, %v359
        %v678 = vand.u32 %v677, 8388607
        %v679 = vor.u32 %v678, 8388608
        %v680 = vsub.s32 0, %v679
        %v681 = vadd.s32 %v676, 1
        %vm682 = vcmp.gt.s32.totalorder %v681, 0
        %v683 = vsel %vm682, %v681, 0
        %v684 = vshrl.u32 %v683, 5
        %v685 = vand.u32 %v683, 31
        %v686 = vsub.s32 32, %v685
        %v687 = vshrl.u32 683565275, %v686
        %v688 = vshll.u32 683565275, %v685
        %v689 = vshrl.u32 2475754826, %v686
        %v690 = vor.u32 %v688, %v689
        %v691 = vshll.u32 2475754826, %v685
        %v692 = vshrl.u32 2131351028, %v686
        %v693 = vor.u32 %v691, %v692
        %v694 = vshll.u32 2131351028, %v685
        %v695 = vshrl.u32 2102212464, %v686
        %v696 = vor.u32 %v694, %v695
        %v697 = vshll.u32 2102212464, %v685
        %v698 = vshrl.u32 920167782, %v686
        %v699 = vor.u32 %v697, %v698
        %v700 = vshll.u32 920167782, %v685
        %v701 = vshrl.u32 1326507024, %v686
        %v702 = vor.u32 %v700, %v701
        %vm703 = vcmp.lt.s32.totalorder %v684, 1
        %vm704 = vcmp.lt.s32.totalorder %v684, 2
        %vm705 = vcmp.lt.s32.totalorder %v684, 3
        %vm706 = vcmp.lt.s32.totalorder %v684, 4
        %v707 = vsel %vm703, %v687, %v690
        %v708 = vsel %vm706, %v696, 2102212464
        %v709 = vsel %vm705, %v693, %v708
        %v710 = vsel %vm704, %v707, %v709
        %v711 = vsel %vm703, %v690, %v693
        %v712 = vsel %vm706, %v699, 920167782
        %v713 = vsel %vm705, %v696, %v712
        %v714 = vsel %vm704, %v711, %v713
        %v715 = vsel %vm703, %v693, %v696
        %v716 = vsel %vm706, %v702, 1326507024
        %v717 = vsel %vm705, %v699, %v716
        %v718 = vsel %vm704, %v715, %v717
        %v719 = vshll.u32 %v679, 8
        %v720 = vand.u32 %v719, 65535
        %v721 = vshrl.u32 %v719, 16
        %v722 = vand.u32 %v718, 65535
        %v723 = vshrl.u32 %v718, 16
        %v724 = vmul.u32 %v720, %v722
        %v725 = vmul.u32 %v720, %v723
        %v726 = vmul.u32 %v721, %v722
        %v727 = vmul.u32 %v721, %v723
        %v728 = vshll.u32 %v725, 16
        %v729 = vshrl.u32 %v725, 16
        %v730 = vshll.u32 %v726, 16
        %v731 = vshrl.u32 %v726, 16
        %vm732 = vc.u32 %v724, %v728
        %v733 = vsel %vm732, 1, 0
        %v734 = vadd.s32 %v724, %v728
        %v735 = vadd.s32 %v727, %v733
        %vm736 = vc.u32 %v734, %v730
        %v737 = vsel %vm736, 1, 0
        %v738 = vadd.s32 %v734, %v730
        %v739 = vadd.s32 %v735, %v737
        %v740 = vadd.s32 %v739, %v729
        %v741 = vadd.s32 %v740, %v731
        %v742 = vand.u32 %v719, 65535
        %v743 = vshrl.u32 %v719, 16
        %v744 = vand.u32 %v714, 65535
        %v745 = vshrl.u32 %v714, 16
        %v746 = vmul.u32 %v742, %v744
        %v747 = vmul.u32 %v742, %v745
        %v748 = vmul.u32 %v743, %v744
        %v749 = vmul.u32 %v743, %v745
        %v750 = vshll.u32 %v747, 16
        %v751 = vshrl.u32 %v747, 16
        %v752 = vshll.u32 %v748, 16
        %v753 = vshrl.u32 %v748, 16
        %vm754 = vc.u32 %v746, %v750
        %v755 = vsel %vm754, 1, 0
        %v756 = vadd.s32 %v746, %v750
        %v757 = vadd.s32 %v749, %v755
        %vm758 = vc.u32 %v756, %v752
        %v759 = vsel %vm758, 1, 0
        %v760 = vadd.s32 %v756, %v752
        %v761 = vadd.s32 %v757, %v759
        %v762 = vadd.s32 %v761, %v751
        %v763 = vadd.s32 %v762, %v753
        %v764 = vmul.u32 %v719, %v710
        %v765 = vadd.s32 %v741, %v760
        %vm766 = vc.u32 %v741, %v760
        %v767 = vadd.s32 %v763, 1
        %v768 = vsel %vm766, %v767, %v763
        %v769 = vadd.s32 %v764, %v768
        %v770 = vadd.s32 %v769, 536870912
        %v771 = vshrl.u32 %v770, 30
        %v772 = vshll.u32 %v771, 30
        %v773 = vsub.s32 %v769, %v772
        %vm774 = vcmp.lt.s32.totalorder %v773, 0
        %v775 = vsub.s32 0, %v773
        %v776 = vsel %vm774, %v775, %v773
        %v777 = vclz %v776
        %v778 = vsub.s32 %v777, 2
        %vm779 = vcmp.gt.s32.totalorder 0, %v778
        %v780 = vsel %vm779, 0, %v778
        %v781 = vsub.s32 32, %v780
        %v782 = vshll.u32 %v773, %v780
        %v783 = vshrl.u32 %v765, %v781
        %v784 = vor.u32 %v782, %v783
        %v785 = vsub.s32 4294967266, %v780
        %v786 = vadd.s32 %v785, 127
        %v787 = vshll.u32 %v786, 23
        %v788 = vor.u32 4788187, %v787
        %v789 = vand.u32 2147483647, %v788
        %v791 = vcvt.s32.f32 %v784
        %v792 = vmul.f32 %v791, %v789
        %v793 = vxor.u32 %v792, 2147483648
        %v794 = vsel %vm673, %v793, %v792
        %v795 = vsub.s32 4, %v771
        %v796 = vsel %vm673, %v795, %v771
        %v797 = vsel %vm672, %v359, %v794
        %v798 = vsel %vm672, 0, %v796
        %v799 = vmul.f32 %v797, %v797
        %v800 = vmul.f32 %v799, -0.001358992
        %v801 = vadd.f32 %v800, 0.041655596
        %v802 = vmul.f32 %v799, %v801
        %v803 = vadd.f32 %v802, -0.4999988
        %v804 = vmul.f32 %v799, %v803
        %v805 = vadd.f32 1.0, %v804
        %v806 = vmul.f32 %v797, %v797
        %v807 = vmul.f32 %v806, -0.00019511016
        %v808 = vadd.f32 %v807, 0.008332121
        %v809 = vmul.f32 %v806, %v808
        %v810 = vadd.f32 %v809, -0.16666654
        %v811 = vmul.f32 %v806, %v810
        %v812 = vadd.f32 %v811, 1.0
        %v813 = vmul.f32 %v812, %v797
        %vm814 = vweird.f32 %v359
        %v815 = vadd.s32 %v798, 3
        %v816 = vand.u32 %v815, 3
        %vm817 = vcmp.lt.s32.totalorder %v816, 2
        %vm818 = vcmp.eq.s32.totalorder %v816, 0
        %v819 = vxor.u32 %v813, 2147483648
        %v820 = vsel %vm818, %v805, %v819
        %vm821 = vcmp.eq.s32.totalorder %v816, 2
        %v822 = vxor.u32 %v805, 2147483648
        %v823 = vsel %vm821, %v822, %v813
        %v824 = vsel %vm817, %v820, %v823
        %v825 = vsel %vm814, nan, %v824
        %v826 = vand.u32 2147483647, %v360
        %vm827 = vcmp.le.f32.partialorder %v826, 0.7853982
        %vm828 = vcmp.lt.s32.totalorder %v360, 0
        %v829 = vand.u32 %v360, 2139095040
        %v830 = vshrl.u32 %v829, 23
        %v831 = vsub.s32 %v830, 127
        %v832 = vand.u32 2147483647, %v360
        %v833 = vand.u32 %v832, 8388607
        %v834 = vor.u32 %v833, 8388608
        %v835 = vsub.s32 0, %v834
        %v836 = vadd.s32 %v831, 1
        %vm837 = vcmp.gt.s32.totalorder %v836, 0
        %v838 = vsel %vm837, %v836, 0
        %v839 = vshrl.u32 %v838, 5
        %v840 = vand.u32 %v838, 31
        %v841 = vsub.s32 32, %v840
        %v842 = vshrl.u32 683565275, %v841
        %v843 = vshll.u32 683565275, %v840
        %v844 = vshrl.u32 2475754826, %v841
        %v845 = vor.u32 %v843, %v844
        %v846 = vshll.u32 2475754826, %v840
        %v847 = vshrl.u32 2131351028, %v841
        %v848 = vor.u32 %v846, %v847
        %v849 = vshll.u32 2131351028, %v840
        %v850 = vshrl.u32 2102212464, %v841
        %v851 = vor.u32 %v849, %v850
        %v852 = vshll.u32 2102212464, %v840
        %v853 = vshrl.u32 920167782, %v841
        %v854 = vor.u32 %v852, %v853
        %v855 = vshll.u32 920167782, %v840
        %v856 = vshrl.u32 1326507024, %v841
        %v857 = vor.u32 %v855, %v856
        %vm858 = vcmp.lt.s32.totalorder %v839, 1
        %vm859 = vcmp.lt.s32.totalorder %v839, 2
        %vm860 = vcmp.lt.s32.totalorder %v839, 3
        %vm861 = vcmp.lt.s32.totalorder %v839, 4
        %v862 = vsel %vm858, %v842, %v845
        %v863 = vsel %vm861, %v851, 2102212464
        %v864 = vsel %vm860, %v848, %v863
        %v865 = vsel %vm859, %v862, %v864
        %v866 = vsel %vm858, %v845, %v848
        %v867 = vsel %vm861, %v854, 920167782
        %v868 = vsel %vm860, %v851, %v867
        %v869 = vsel %vm859, %v866, %v868
        %v870 = vsel %vm858, %v848, %v851
        %v871 = vsel %vm861, %v857, 1326507024
        %v872 = vsel %vm860, %v854, %v871
        %v873 = vsel %vm859, %v870, %v872
        %v874 = vshll.u32 %v834, 8
        %v875 = vand.u32 %v874, 65535
        %v876 = vshrl.u32 %v874, 16
        %v877 = vand.u32 %v873, 65535
        %v878 = vshrl.u32 %v873, 16
        %v879 = vmul.u32 %v875, %v877
        %v880 = vmul.u32 %v875, %v878
        %v881 = vmul.u32 %v876, %v877
        %v882 = vmul.u32 %v876, %v878
        %v883 = vshll.u32 %v880, 16
        %v884 = vshrl.u32 %v880, 16
        %v885 = vshll.u32 %v881, 16
        %v886 = vshrl.u32 %v881, 16
        %vm887 = vc.u32 %v879, %v883
        %v888 = vsel %vm887, 1, 0
        %v889 = vadd.s32 %v879, %v883
        %v890 = vadd.s32 %v882, %v888
        %vm891 = vc.u32 %v889, %v885
        %v892 = vsel %vm891, 1, 0
        %v893 = vadd.s32 %v889, %v885
        %v894 = vadd.s32 %v890, %v892
        %v895 = vadd.s32 %v894, %v884
        %v896 = vadd.s32 %v895, %v886
        %v897 = vand.u32 %v874, 65535
        %v898 = vshrl.u32 %v874, 16
        %v899 = vand.u32 %v869, 65535
        %v900 = vshrl.u32 %v869, 16
        %v901 = vmul.u32 %v897, %v899
        %v902 = vmul.u32 %v897, %v900
        %v903 = vmul.u32 %v898, %v899
        %v904 = vmul.u32 %v898, %v900
        %v905 = vshll.u32 %v902, 16
        %v906 = vshrl.u32 %v902, 16
        %v907 = vshll.u32 %v903, 16
        %v908 = vshrl.u32 %v903, 16
        %vm909 = vc.u32 %v901, %v905
        %v910 = vsel %vm909, 1, 0
        %v911 = vadd.s32 %v901, %v905
        %v912 = vadd.s32 %v904, %v910
        %vm913 = vc.u32 %v911, %v907
        %v914 = vsel %vm913, 1, 0
        %v915 = vadd.s32 %v911, %v907
        %v916 = vadd.s32 %v912, %v914
        %v917 = vadd.s32 %v916, %v906
        %v918 = vadd.s32 %v917, %v908
        %v919 = vmul.u32 %v874, %v865
        %v920 = vadd.s32 %v896, %v915
        %vm921 = vc.u32 %v896, %v915
        %v922 = vadd.s32 %v918, 1
        %v923 = vsel %vm921, %v922, %v918
        %v924 = vadd.s32 %v919, %v923
        %v925 = vadd.s32 %v924, 536870912
        %v926 = vshrl.u32 %v925, 30
        %v927 = vshll.u32 %v926, 30
        %v928 = vsub.s32 %v924, %v927
        %vm929 = vcmp.lt.s32.totalorder %v928, 0
        %v930 = vsub.s32 0, %v928
        %v931 = vsel %vm929, %v930, %v928
        %v932 = vclz %v931
        %v933 = vsub.s32 %v932, 2
        %vm934 = vcmp.gt.s32.totalorder 0, %v933
        %v935 = vsel %vm934, 0, %v933
        %v936 = vsub.s32 32, %v935
        %v937 = vshll.u32 %v928, %v935
        %v938 = vshrl.u32 %v920, %v936
        %v939 = vor.u32 %v937, %v938
        %v940 = vsub.s32 4294967266, %v935
        %v941 = vadd.s32 %v940, 127
        %v942 = vshll.u32 %v941, 23
        %v943 = vor.u32 4788187, %v942
        %v944 = vand.u32 2147483647, %v943
        %v946 = vcvt.s32.f32 %v939
        %v947 = vmul.f32 %v946, %v944
        %v948 = vxor.u32 %v947, 2147483648
        %v949 = vsel %vm828, %v948, %v947
        %v950 = vsub.s32 4, %v926
        %v951 = vsel %vm828, %v950, %v926
        %v952 = vsel %vm827, %v360, %v949
        %v953 = vsel %vm827, 0, %v951
        %v954 = vmul.f32 %v952, %v952
        %v955 = vmul.f32 %v954, -0.001358992
        %v956 = vadd.f32 %v955, 0.041655596
        %v957 = vmul.f32 %v954, %v956
        %v958 = vadd.f32 %v957, -0.4999988
        %v959 = vmul.f32 %v954, %v958
        %v960 = vadd.f32 1.0, %v959
        %v961 = vmul.f32 %v952, %v952
        %v962 = vmul.f32 %v961, -0.00019511016
        %v963 = vadd.f32 %v962, 0.008332121
        %v964 = vmul.f32 %v961, %v963
        %v965 = vadd.f32 %v964, -0.16666654
        %v966 = vmul.f32 %v961, %v965
        %v967 = vadd.f32 %v966, 1.0
        %v968 = vmul.f32 %v967, %v952
        %vm969 = vweird.f32 %v360
        %v970 = vadd.s32 %v953, 3
        %v971 = vand.u32 %v970, 3
        %vm972 = vcmp.lt.s32.totalorder %v971, 2
        %vm973 = vcmp.eq.s32.totalorder %v971, 0
        %v974 = vxor.u32 %v968, 2147483648
        %v975 = vsel %vm973, %v960, %v974
        %vm976 = vcmp.eq.s32.totalorder %v971, 2
        %v977 = vxor.u32 %v960, 2147483648
        %v978 = vsel %vm976, %v977, %v968
        %v979 = vsel %vm972, %v975, %v978
        %v980 = vsel %vm969, nan, %v979
        %v981 = vmul.f32 %v341, %v825
        %v982 = vmul.f32 %v344, %v980
        %v983 = vadd.f32 %v669, %v981
        %v984 = vadd.f32 %v670, %v982
        %985 = vst [vmem:[%s269] sm:$0xff] %v983
        %986 = vst [vmem:[%s269 + $0x8] sm:$0xff] %v984
        %s987 = sand.u32 %s175, 1
        %s988 = scalar_lea.sflag [#allocation3], %s987
        %s989 = sand.u32 %s175, 1
        %s990 = smul.addr %s989, 16
        %s991 = scalar_lea.vmem [#allocation2], %s990
        // Predicated region
        $region45: #{tpu_custom_call.1} parent=43 // pred_check
          %p992 = pneg %p185
        $region46: #{tpu_custom_call.1} parent=43 // pred_check_branch
          %994 = sbr.rel (%p992) target = $region48
        $region47: #{tpu_custom_call.1} parent=43 // pred_region
          %s995 = smul.u32 2, %s25
          %997 = vsyncadd %s988, 0
          %s998 = smul.addr %s24, 2
          %s999 = sadd.s32 %s995, %s998
          %s1000 = smul.addr %s999, 8
          %s1001 = scalar_lea.hbm %s6, %s1000
          %s1002 = sshll.u32 %s991, 4
          %s1003 = int_to_ptr.vmem [resolvable:$true] %s1002
          %s1004 = sshll.u32 %s1001, 4
          %s1005 = int_to_ptr.hbm [resolvable:$true] %s1004
          %1010 = dma.vmem_to_hbm [thread:$0]  %s1003, 256, %s1005, %s988, 128, 128, 8
        $region48: #{tpu_custom_call.1} parent=43 // pred_fallthru
          _
      $region44: #{tpu_custom_call.1} parent=5 // pred_fallthru
        _
      %p1011 = scmp.le.s32.totalorder 2, %s15
      // Predicated region
      $region49: #{tpu_custom_call.1} parent=5 // pred_check
        %p1012 = pneg %p1011
      $region50: #{tpu_custom_call.1} parent=5 // pred_check_branch
        %1014 = sbr.rel (%p1012) target = $region52
      $region51: #{tpu_custom_call.1} parent=5 // pred_region
        %s1015 = ssub.s32 %s15, 2
        // Predicated region
        $region53: #{tpu_custom_call.1} parent=51 // pred_check
          %p1016 = pneg %p191
        $region54: #{tpu_custom_call.1} parent=51 // pred_check_branch
          %1018 = sbr.rel (%p1016) target = $region56
        $region55: #{tpu_custom_call.1} parent=51 // pred_region
          %s1019 = sand.u32 %s176, 1
          %s1020 = scalar_lea.sflag [#allocation3], %s1019
          %s1021 = sand.u32 %s176, 1
          %s1022 = smul.addr %s1021, 16
          %s1023 = scalar_lea.vmem [#allocation2], %s1022
          %1025 = dma.done %s1020, 256
        $region56: #{tpu_custom_call.1} parent=51 // pred_fallthru
          _
      $region52: #{tpu_custom_call.1} parent=5 // pred_fallthru
        _
    $region6: #{tpu_custom_call.1} parent=1 // loop_footer
      %s19 = sadd.s32 1, %s15
    $region7: #{tpu_custom_call.1} parent=1 // loop_footer_branch
      %14 = sbr.rel target = $region3
    $region8: #{tpu_custom_call.1} parent=1 // loop_exit
      _
    %1026 = vsyncpa [#allocation3], 1
    %s1027 = scalar_lea.sflag [#allocation3], 1
    %1028 = vsyncpa %s1027, 1

</llo_original>
